<compile_context>
chip_gen: v6e
topology: v6e:2x2x1
jax: 0.10.0
libtpu: 0.0.40
codegen_flags: <defaults>
</compile_context>

<pallas_src>
import functools

import jax
import jax.numpy as jnp
from jax.experimental import pallas as pl
from jax.experimental.pallas import tpu as pltpu

LANES = 128
ACC_ROWS = 32            # accumulator scratch rows (4 vregs of f32)
MAX_BLOCK_ROWS = 4096    # (4096,128) f32 block = 2 MiB; 8 MiB double-buffered total.


def _round_up(x, m):
    return (x + m - 1) // m * m


def _num_tensorcores():
    """Best-effort TensorCore-per-device count; defaults to 1 (v5e/v6e)."""
    try:
        d = jax.devices()[0]
        for attr in ("num_cores", "num_tensorcores", "core_count"):
            v = getattr(d, attr, None)
            if isinstance(v, int) and v >= 1:
                return min(int(v), 2)
    except Exception:
        pass
    return 1


def _rmsle_kernel(pred_ref, actual_ref, out_ref, acc_ref, *,
                  rows, block_rows, blocks_per_slice, num_blocks, apply_mask):
    j = pl.program_id(1)

    @pl.when(j == 0)
    def _():
        acc_ref[...] = jnp.zeros_like(acc_ref)

    def contrib(p_blk, a_blk):
        d = jnp.log1p(p_blk) - jnp.log1p(a_blk)
        sq = d * d
        # Pure VPU accumulation into a (32,128) accumulator: 4 independent vreg
        # chains, no per-step cross-lane reduce.
        return jnp.sum(sq.reshape(block_rows // ACC_ROWS, ACC_ROWS, LANES), axis=0)

    if not apply_mask:
        # Fast path for every block: no iota / compare / select anywhere.
        p_blk = pred_ref[...].astype(jnp.float32)
        a_blk = actual_ref[...].astype(jnp.float32)
        acc_ref[...] += contrib(p_blk, a_blk)
    else:
        b = pl.program_id(0) * blocks_per_slice + j

        @pl.when(b < num_blocks - 1)
        def _():
            # Full blocks: unmasked fast path.
            p_blk = pred_ref[...].astype(jnp.float32)
            a_blk = actual_ref[...].astype(jnp.float32)
            acc_ref[...] += contrib(p_blk, a_blk)

        @pl.when(b == num_blocks - 1)
        def _():
            # Ragged tail block only: zero invalid rows BEFORE log1p so OOB garbage
            # can never produce NaN/Inf.
            p_blk = pred_ref[...].astype(jnp.float32)
            a_blk = actual_ref[...].astype(jnp.float32)
            row0 = (num_blocks - 1) * block_rows
            local = jax.lax.broadcasted_iota(jnp.int32, (block_rows, LANES), 0)
            valid = (local + row0) < rows
            p_blk = jnp.where(valid, p_blk, 0.0)
            a_blk = jnp.where(valid, a_blk, 0.0)
            acc_ref[...] += contrib(p_blk, a_blk)
        # Phantom blocks (b >= num_blocks, uneven core split): contribute nothing.

    @pl.when(j == blocks_per_slice - 1)
    def _():
        out_ref[...] = acc_ref[...][None, :, :]


def rmsle_loss(pred, actual):
    """RMSLE loss matching torch.sqrt(MSELoss()(log(pred+1), log(actual+1)))."""
    assert pred.shape == actual.shape
    n = pred.size
    if n == 0:
        # torch mean over empty tensor is NaN.
        return jnp.float32(float("nan"))

    # Stream in native floating dtype; cast to f32 inside the kernel.
    if not jnp.issubdtype(pred.dtype, jnp.floating):
        pred = pred.astype(jnp.float32)
    if not jnp.issubdtype(actual.dtype, jnp.floating):
        actual = actual.astype(jnp.float32)

    p = jnp.ravel(pred)
    a = jnp.ravel(actual)

    rows_raw = pl.cdiv(n, LANES)
    if rows_raw >= MAX_BLOCK_ROWS:
        # Large input: big streaming tiles; only lane-align (no-op when n % 128 == 0).
        block_rows = MAX_BLOCK_ROWS
        padded_n = _round_up(n, LANES)
    else:
        # Small input: a single 32-row-aligned block covering everything.
        block_rows = _round_up(rows_raw, ACC_ROWS)
        padded_n = block_rows * LANES

    if padded_n != n:
        # Zero padding contributes log1p(0) - log1p(0) = 0; mean still divides by n.
        p = jnp.pad(p, (0, padded_n - n))
        a = jnp.pad(a, (0, padded_n - n))

    rows = padded_n // LANES
    p2 = p.reshape(rows, LANES)
    a2 = a.reshape(rows, LANES)

    num_blocks = pl.cdiv(rows, block_rows)
    num_cores = _num_tensorcores()
    # Split across TensorCores only if the chip really has >1 (v7x); on v5e/v6e a
    # multi-slice grid is just a serial loop with extra (phantom-block) waste.
    num_slices = num_cores if (num_cores > 1 and num_blocks >= num_cores) else 1
    blocks_per_slice = pl.cdiv(num_blocks, num_slices)
    apply_mask = (rows % block_rows != 0) or (num_slices * blocks_per_slice != num_blocks)

    kernel = functools.partial(
        _rmsle_kernel,
        rows=rows,
        block_rows=block_rows,
        blocks_per_slice=blocks_per_slice,
        num_blocks=num_blocks,
        apply_mask=apply_mask,
    )

    def in_map(p_idx, j):
        b = p_idx * blocks_per_slice + j
        # Clamp phantom blocks (uneven split across slices); the kernel skips their
        # contribution entirely.
        return (jnp.minimum(b, num_blocks - 1), 0)

    if num_slices > 1:
        dims = (pltpu.CORE_PARALLEL, pltpu.ARBITRARY)
    else:
        dims = ("arbitrary", "arbitrary")

    partials = pl.pallas_call(
        kernel,
        out_shape=jax.ShapeDtypeStruct((num_slices, ACC_ROWS, LANES), jnp.float32),
        grid_spec=pltpu.PrefetchScalarGridSpec(
            num_scalar_prefetch=0,
            grid=(num_slices, blocks_per_slice),
            in_specs=[
                pl.BlockSpec((block_rows, LANES), in_map),
                pl.BlockSpec((block_rows, LANES), in_map),
            ],
            out_specs=pl.BlockSpec((1, ACC_ROWS, LANES), lambda p_idx, j: (p_idx, 0, 0)),
            scratch_shapes=[pltpu.VMEM((ACC_ROWS, LANES), jnp.float32)],
        ),
        compiler_params=pltpu.CompilerParams(dimension_semantics=dims),
    )(p2, a2)

    # Single final cross-lane reduce + sqrt on a tiny (num_slices, 32, 128) array.
    return jnp.sqrt(jnp.sum(partials) / n)


def _reference(pred, actual):
    p = pred.astype(jnp.float32)
    a = actual.astype(jnp.float32)
    return jnp.sqrt(jnp.mean((jnp.log1p(p) - jnp.log1p(a)) ** 2))


if __name__ == "__main__":
    key = jax.random.PRNGKey(0)
    k1, k2, k3, k4 = jax.random.split(key, 4)

    # Image-regression-like shape (N, C, H, W).
    pred = jax.random.uniform(k1, (2, 4, 16, 16), dtype=jnp.float32, minval=0.0, maxval=5.0)
    actual = jax.random.uniform(k2, (2, 4, 16, 16), dtype=jnp.float32, minval=0.0, maxval=5.0)
    loss = rmsle_loss(pred, actual)
    jax.block_until_ready(loss)
    assert jnp.allclose(loss, _reference(pred, actual), rtol=1e-5, atol=1e-6), (
        loss, _reference(pred, actual))

    # Non-lane-aligned small shape: exercises the zero-padding path.
    pred2 = jax.random.uniform(k3, (3, 5, 7, 11), dtype=jnp.float32, minval=0.0, maxval=3.0)
    actual2 = jax.random.uniform(k4, (3, 5, 7, 11), dtype=jnp.float32, minval=0.0, maxval=3.0)
    loss2 = rmsle_loss(pred2, actual2)
    jax.block_until_ready(loss2)
    assert jnp.allclose(loss2, _reference(pred2, actual2), rtol=1e-5, atol=1e-6), (
        loss2, _reference(pred2, actual2))

    print("KERNEL_OK")
</pallas_src>

<mosaic_0001>
module attributes {stable_mosaic.version = 11 : i64} {
  func.func @_rmsle_kernel(%arg0: i32, %arg1: i32, %arg2: memref<32x128xf32, #tpu.memory_space<vmem>>, %arg3: memref<32x128xf32, #tpu.memory_space<vmem>>, %arg4: memref<1x32x128xf32, #tpu.memory_space<vmem>>, %arg5: memref<32x128xf32, #tpu.memory_space<vmem>>) attributes {dimension_semantics = [#tpu.dimension_semantics<arbitrary>, #tpu.dimension_semantics<arbitrary>], iteration_bounds = array<i64: 1, 1>, scalar_prefetch = 0 : i64, scratch_operands = 1 : i64, tpu.core_type = #tpu.core_type<tc>, window_params = [{transform_indices = @transform_0, window_bounds = array<i64: 32, 128>}, {transform_indices = @transform_1, window_bounds = array<i64: 32, 128>}, {transform_indices = @transform_2, window_bounds = array<i64: 1, 32, 128>}]} {
    %c0_i32 = arith.constant 0 : i32
    %0 = arith.cmpi eq, %arg1, %c0_i32 : i32
    %1 = arith.extui %0 : i1 to i32
    %c0_i32_0 = arith.constant 0 : i32
    %2 = arith.cmpi ne, %1, %c0_i32_0 : i32
    scf.if %2 {
      %cst_10 = arith.constant 0.000000e+00 : f32
      %17 = vector.broadcast %cst_10 : f32 to vector<32x128xf32>
      %c0_11 = arith.constant 0 : index
      %c0_12 = arith.constant 0 : index
      %18 = vector.load %arg5[%c0_11, %c0_12] : memref<32x128xf32, #tpu.memory_space<vmem>>, vector<32x128xf32>
      tpu.vector_store %arg5[%c0_11, %c0_12], %17 {strides = array<i32>} : memref<32x128xf32, #tpu.memory_space<vmem>>, vector<32x128xf32>,
    } else {
    }
    %c0 = arith.constant 0 : index
    %c0_1 = arith.constant 0 : index
    %3 = vector.load %arg2[%c0, %c0_1] : memref<32x128xf32, #tpu.memory_space<vmem>>, vector<32x128xf32>
    %c0_2 = arith.constant 0 : index
    %c0_3 = arith.constant 0 : index
    %4 = vector.load %arg3[%c0_2, %c0_3] : memref<32x128xf32, #tpu.memory_space<vmem>>, vector<32x128xf32>
    %c0_4 = arith.constant 0 : index
    %c0_5 = arith.constant 0 : index
    %5 = vector.load %arg5[%c0_4, %c0_5] : memref<32x128xf32, #tpu.memory_space<vmem>>, vector<32x128xf32>
    %6 = math.log1p %3 : vector<32x128xf32>
    %7 = math.log1p %4 : vector<32x128xf32>
    %8 = arith.subf %6, %7 : vector<32x128xf32>
    %9 = arith.mulf %8, %8 : vector<32x128xf32>
    %10 = vector.shape_cast %9 : vector<32x128xf32> to vector<1x32x128xf32>
    %cst = arith.constant dense<0.000000e+00> : vector<32x128xf32>
    %11 = vector.multi_reduction <add>, %10, %cst [0] : vector<1x32x128xf32> to vector<32x128xf32>
    %12 = arith.addf %5, %11 : vector<32x128xf32>
    %c0_6 = arith.constant 0 : index
    %c0_7 = arith.constant 0 : index
    %13 = vector.load %arg5[%c0_6, %c0_7] : memref<32x128xf32, #tpu.memory_space<vmem>>, vector<32x128xf32>
    tpu.vector_store %arg5[%c0_6, %c0_7], %12 {strides = array<i32>} : memref<32x128xf32, #tpu.memory_space<vmem>>, vector<32x128xf32>,
    %c0_i32_8 = arith.constant 0 : i32
    %14 = arith.cmpi eq, %arg1, %c0_i32_8 : i32
    %15 = arith.extui %14 : i1 to i32
    %c0_i32_9 = arith.constant 0 : i32
    %16 = arith.cmpi ne, %15, %c0_i32_9 : i32
    scf.if %16 {
      %c0_10 = arith.constant 0 : index
      %c0_11 = arith.constant 0 : index
      %17 = vector.load %arg5[%c0_10, %c0_11] : memref<32x128xf32, #tpu.memory_space<vmem>>, vector<32x128xf32>
      %18 = vector.shape_cast %17 : vector<32x128xf32> to vector<1x32x128xf32>
      %c0_12 = arith.constant 0 : index
      %c0_13 = arith.constant 0 : index
      %c0_14 = arith.constant 0 : index
      %19 = vector.load %arg4[%c0_12, %c0_13, %c0_14] : memref<1x32x128xf32, #tpu.memory_space<vmem>>, vector<1x32x128xf32>
      tpu.vector_store %arg4[%c0_12, %c0_13, %c0_14], %18 {strides = array<i32>} : memref<1x32x128xf32, #tpu.memory_space<vmem>>, vector<1x32x128xf32>,
    } else {
    }
    return
  }
  func.func @transform_0(%arg0: i32, %arg1: i32) -> (i32, i32) {
    %c1_i32 = arith.constant 1 : i32
    %0 = arith.muli %arg0, %c1_i32 : i32
    %1 = arith.addi %0, %arg1 : i32
    %c0_i32 = arith.constant 0 : i32
    %2 = arith.minsi %1, %c0_i32 : i32
    %c0_i32_0 = arith.constant 0 : i32
    %c0_i32_1 = arith.constant 0 : i32
    return %2, %c0_i32_0 : i32, i32
  }
  func.func @transform_1(%arg0: i32, %arg1: i32) -> (i32, i32) {
    %c1_i32 = arith.constant 1 : i32
    %0 = arith.muli %arg0, %c1_i32 : i32
    %1 = arith.addi %0, %arg1 : i32
    %c0_i32 = arith.constant 0 : i32
    %2 = arith.minsi %1, %c0_i32 : i32
    %c0_i32_0 = arith.constant 0 : i32
    %c0_i32_1 = arith.constant 0 : i32
    return %2, %c0_i32_0 : i32, i32
  }
  func.func @transform_2(%arg0: i32, %arg1: i32) -> (i32, i32, i32) {
    %c0_i32 = arith.constant 0 : i32
    %c0_i32_0 = arith.constant 0 : i32
    %c0_i32_1 = arith.constant 0 : i32
    return %arg0, %c0_i32, %c0_i32_0 : i32, i32, i32
  }
}

</mosaic_0001>

<llo_original>
// kernel: tpu_custom_call.1
$region0: #{tpu_custom_call.1}
  #allocation0 [shape = 'u32[]', space=smem, size = 0x4, offset = 0x4, fixed_abs, tag = 'smem constant byte address 0x4 - core index']
  #allocation1 [shape = 'u32[144,128]{1,0:T(1,128)}', space=vmem, size = 0x12000, scoped, tag = 'internal scratch']
  #allocation2 [shape = 'f32[32,128]{1,0:T(8,128)}', space=vmem, size = 0x4000, scoped, tag = 'scratch operand']
  %s0 = inlined_call_operand.hbm [shape: f32[32,128], index: 0, kind: input, shape index: {}]
  %s1 = inlined_call_operand.hbm [shape: f32[32,128], index: 1, kind: input, shape index: {}]
  %s2 = inlined_call_operand.hbm [shape: f32[1,32,128], index: 2, kind: output, shape index: {}]
  %s3 = sld [smem:[#allocation0]]
  $region34: #{tpu_custom_call.1} parent=0
    _
  %s5 = ssub.s32 1, %s3
  %s6 = scalar_select 0, %s5, %s3
  $region1: #{tpu_custom_call.1} parent=0
    #allocation3 [shape = 'u8[16384]{0}', space=vmem, size = 0x4000, scoped, tag = 'input window, operand 0, single buffered']
    #allocation4 [shape = 's32[1]{0}', space=sflag, size = 0x4, scoped, tag = 'scoped memory for tpu_custom_call.1']
    #allocation5 [shape = 's32[1]{0}', space=sflag, size = 0x4, scoped, tag = 'scoped memory for tpu_custom_call.1']
    #allocation6 [shape = 'u8[16384]{0}', space=vmem, size = 0x4000, scoped, tag = 'input window, operand 1, single buffered']
    #allocation7 [shape = 's32[1]{0}', space=sflag, size = 0x4, scoped, tag = 'scoped memory for tpu_custom_call.1']
    #allocation8 [shape = 'u8[16384]{0}', space=vmem, size = 0x4000, scoped, tag = 'output window, operand 0, single buffered']
    %7 = vsyncpa [#allocation4], 0
    %8 = vsyncpa [#allocation7], 0
    %9 = vsyncpa [#allocation5], 0
    // Predicated region
    $region2: #{tpu_custom_call.1} parent=1 // pred_check
      _
    $region3: #{tpu_custom_call.1} parent=1 // pred_check_branch
      %11 = sbr.rel (0) target = $region5
    $region4: #{tpu_custom_call.1} parent=1 // pred_region
      %s12 = sadd.s32 0, 0
      %p13 = scmp.lt.s32.totalorder %s12, 0
      %s14 = scalar_select %p13, %s12, 0
      %s15 = smul.u32 4, %s14
      %s17 = ssub.s32 512, 512
      %18 = vsyncadd [#allocation4], %s17
      %s19 = smul.addr %s15, 128
      %s20 = scalar_lea.hbm %s0, %s19
      %s21 = sshll.u32 [#allocation3], 4
      %s22 = int_to_ptr.vmem [resolvable:$true] %s21
      %27 = dma.hbm_to_vmem [thread:$0]  %s20, 512, %s22, [#allocation4], 128, 128, 8
    $region5: #{tpu_custom_call.1} parent=1 // pred_fallthru
      _
    // Predicated region
    $region6: #{tpu_custom_call.1} parent=1 // pred_check
      _
    $region7: #{tpu_custom_call.1} parent=1 // pred_check_branch
      %29 = sbr.rel (0) target = $region9
    $region8: #{tpu_custom_call.1} parent=1 // pred_region
      %s30 = sadd.s32 0, 0
      %p31 = scmp.lt.s32.totalorder %s30, 0
      %s32 = scalar_select %p31, %s30, 0
      %s33 = smul.u32 4, %s32
      %s35 = ssub.s32 512, 512
      %36 = vsyncadd [#allocation7], %s35
      %s37 = smul.addr %s33, 128
      %s38 = scalar_lea.hbm %s1, %s37
      %s39 = sshll.u32 [#allocation6], 4
      %s40 = int_to_ptr.vmem [resolvable:$true] %s39
      %45 = dma.hbm_to_vmem [thread:$0]  %s38, 512, %s40, [#allocation7], 128, 128, 8
    $region9: #{tpu_custom_call.1} parent=1 // pred_fallthru
      _
    // Predicated region
    $region10: #{tpu_custom_call.1} parent=1 // pred_check
      _
    $region11: #{tpu_custom_call.1} parent=1 // pred_check_branch
      %47 = sbr.rel (0) target = $region13
    $region12: #{tpu_custom_call.1} parent=1 // pred_region
      %48 = dma.done [#allocation4], 512
    $region13: #{tpu_custom_call.1} parent=1 // pred_fallthru
      _
    // Predicated region
    $region14: #{tpu_custom_call.1} parent=1 // pred_check
      _
    $region15: #{tpu_custom_call.1} parent=1 // pred_check_branch
      %50 = sbr.rel (0) target = $region17
    $region16: #{tpu_custom_call.1} parent=1 // pred_region
      %51 = dma.done [#allocation7], 512
    $region17: #{tpu_custom_call.1} parent=1 // pred_fallthru
      _
    %s52 = sadd.s32 0, 0
    %p53 = scmp.lt.s32.totalorder %s52, 0
    %s54 = scalar_select %p53, %s52, 0
    %s55 = smul.u32 4, %s54
    %s56 = sadd.s32 0, 0
    %p57 = scmp.lt.s32.totalorder %s56, 0
    %s58 = scalar_select %p57, %s56, 0
    %s59 = smul.u32 4, %s58
    %p60 = scmp.eq.s32.totalorder 0, 0
    // Predicated region
    $region18: #{tpu_custom_call.1} parent=1 // pred_check
      %p61 = pneg %p60
    $region19: #{tpu_custom_call.1} parent=1 // pred_check_branch
      %63 = sbr.rel (%p61) target = $region21
    $region20: #{tpu_custom_call.1} parent=1 // pred_region
      %64 = vst [vmem:[#allocation2] sm:$0xff] 0.0
      %65 = vst [vmem:[#allocation2 + $0x8] sm:$0xff] 0.0
      %66 = vst [vmem:[#allocation2 + $0x10] sm:$0xff] 0.0
      %67 = vst [vmem:[#allocation2 + $0x18] sm:$0xff] 0.0
    $region21: #{tpu_custom_call.1} parent=1 // pred_fallthru
      _
    %v68 = vld [vmem:[#allocation3] sm:$0xff]
    %v69 = vld [vmem:[#allocation3 + $0x8] sm:$0xff]
    %v70 = vld [vmem:[#allocation3 + $0x10] sm:$0xff]
    %v71 = vld [vmem:[#allocation3 + $0x18] sm:$0xff]
    %v72 = vld [vmem:[#allocation6] sm:$0xff]
    %v73 = vld [vmem:[#allocation6 + $0x8] sm:$0xff]
    %v74 = vld [vmem:[#allocation6 + $0x10] sm:$0xff]
    %v75 = vld [vmem:[#allocation6 + $0x18] sm:$0xff]
    %v76 = vld [vmem:[#allocation2] sm:$0xff]
    %v77 = vld [vmem:[#allocation2 + $0x8] sm:$0xff]
    %v78 = vld [vmem:[#allocation2 + $0x10] sm:$0xff]
    %v79 = vld [vmem:[#allocation2 + $0x18] sm:$0xff]
    %v80 = vadd.f32 %v68, 1.0
    %v81 = vlog2.pop %v80
    %v82 = vmul.f32 %v81, 0.6931472
    %v83 = vmul.f32 -0.5, %v68
    %v84 = vadd.f32 %v83, 1.0
    %v85 = vmul.f32 %v84, %v68
    %v86 = vand.u32 2147483647, %v68
    %vm87 = vcmp.lt.f32.partialorder %v86, 0.0004427343
    %v88 = vsel %vm87, %v85, %v82
    %v89 = vadd.f32 %v69, 1.0
    %v90 = vlog2.pop %v89
    %v91 = vmul.f32 %v90, 0.6931472
    %v92 = vmul.f32 -0.5, %v69
    %v93 = vadd.f32 %v92, 1.0
    %v94 = vmul.f32 %v93, %v69
    %v95 = vand.u32 2147483647, %v69
    %vm96 = vcmp.lt.f32.partialorder %v95, 0.0004427343
    %v97 = vsel %vm96, %v94, %v91
    %v98 = vadd.f32 %v70, 1.0
    %v99 = vlog2.pop %v98
    %v100 = vmul.f32 %v99, 0.6931472
    %v101 = vmul.f32 -0.5, %v70
    %v102 = vadd.f32 %v101, 1.0
    %v103 = vmul.f32 %v102, %v70
    %v104 = vand.u32 2147483647, %v70
    %vm105 = vcmp.lt.f32.partialorder %v104, 0.0004427343
    %v106 = vsel %vm105, %v103, %v100
    %v107 = vadd.f32 %v71, 1.0
    %v108 = vlog2.pop %v107
    %v109 = vmul.f32 %v108, 0.6931472
    %v110 = vmul.f32 -0.5, %v71
    %v111 = vadd.f32 %v110, 1.0
    %v112 = vmul.f32 %v111, %v71
    %v113 = vand.u32 2147483647, %v71
    %vm114 = vcmp.lt.f32.partialorder %v113, 0.0004427343
    %v115 = vsel %vm114, %v112, %v109
    %v116 = vadd.f32 %v72, 1.0
    %v117 = vlog2.pop %v116
    %v118 = vmul.f32 %v117, 0.6931472
    %v119 = vmul.f32 -0.5, %v72
    %v120 = vadd.f32 %v119, 1.0
    %v121 = vmul.f32 %v120, %v72
    %v122 = vand.u32 2147483647, %v72
    %vm123 = vcmp.lt.f32.partialorder %v122, 0.0004427343
    %v124 = vsel %vm123, %v121, %v118
    %v125 = vadd.f32 %v73, 1.0
    %v126 = vlog2.pop %v125
    %v127 = vmul.f32 %v126, 0.6931472
    %v128 = vmul.f32 -0.5, %v73
    %v129 = vadd.f32 %v128, 1.0
    %v130 = vmul.f32 %v129, %v73
    %v131 = vand.u32 2147483647, %v73
    %vm132 = vcmp.lt.f32.partialorder %v131, 0.0004427343
    %v133 = vsel %vm132, %v130, %v127
    %v134 = vadd.f32 %v74, 1.0
    %v135 = vlog2.pop %v134
    %v136 = vmul.f32 %v135, 0.6931472
    %v137 = vmul.f32 -0.5, %v74
    %v138 = vadd.f32 %v137, 1.0
    %v139 = vmul.f32 %v138, %v74
    %v140 = vand.u32 2147483647, %v74
    %vm141 = vcmp.lt.f32.partialorder %v140, 0.0004427343
    %v142 = vsel %vm141, %v139, %v136
    %v143 = vadd.f32 %v75, 1.0
    %v144 = vlog2.pop %v143
    %v145 = vmul.f32 %v144, 0.6931472
    %v146 = vmul.f32 -0.5, %v75
    %v147 = vadd.f32 %v146, 1.0
    %v148 = vmul.f32 %v147, %v75
    %v149 = vand.u32 2147483647, %v75
    %vm150 = vcmp.lt.f32.partialorder %v149, 0.0004427343
    %v151 = vsel %vm150, %v148, %v145
    %v152 = vsub.f32 %v88, %v124
    %v153 = vsub.f32 %v97, %v133
    %v154 = vsub.f32 %v106, %v142
    %v155 = vsub.f32 %v115, %v151
    %v156 = vmul.f32 %v152, %v152
    %v157 = vmul.f32 %v153, %v153
    %v158 = vmul.f32 %v154, %v154
    %v159 = vmul.f32 %v155, %v155
    %v160 = vadd.f32 %v156, 0.0
    %v161 = vadd.f32 %v157, 0.0
    %v162 = vadd.f32 %v158, 0.0
    %v163 = vadd.f32 %v159, 0.0
    %v164 = vadd.f32 %v76, %v160
    %v165 = vadd.f32 %v77, %v161
    %v166 = vadd.f32 %v78, %v162
    %v167 = vadd.f32 %v79, %v163
    %168 = vst [vmem:[#allocation2] sm:$0xff] %v164
    %169 = vst [vmem:[#allocation2 + $0x8] sm:$0xff] %v165
    %170 = vst [vmem:[#allocation2 + $0x10] sm:$0xff] %v166
    %171 = vst [vmem:[#allocation2 + $0x18] sm:$0xff] %v167
    // Predicated region
    $region22: #{tpu_custom_call.1} parent=1 // pred_check
      %p172 = pneg %p60
    $region23: #{tpu_custom_call.1} parent=1 // pred_check_branch
      %174 = sbr.rel (%p172) target = $region25
    $region24: #{tpu_custom_call.1} parent=1 // pred_region
      %v175 = vld [vmem:[#allocation2] sm:$0xff]
      %v176 = vld [vmem:[#allocation2 + $0x8] sm:$0xff]
      %v177 = vld [vmem:[#allocation2 + $0x10] sm:$0xff]
      %v178 = vld [vmem:[#allocation2 + $0x18] sm:$0xff]
      %179 = vst [vmem:[#allocation8] sm:$0xff] %v175
      %180 = vst [vmem:[#allocation8 + $0x8] sm:$0xff] %v176
      %181 = vst [vmem:[#allocation8 + $0x10] sm:$0xff] %v177
      %182 = vst [vmem:[#allocation8 + $0x18] sm:$0xff] %v178
    $region25: #{tpu_custom_call.1} parent=1 // pred_fallthru
      _
    // Predicated region
    $region26: #{tpu_custom_call.1} parent=1 // pred_check
      _
    $region27: #{tpu_custom_call.1} parent=1 // pred_check_branch
      %184 = sbr.rel (0) target = $region29
    $region28: #{tpu_custom_call.1} parent=1 // pred_region
      %s186 = ssub.s32 512, 512
      %187 = vsyncadd [#allocation5], %s186
      %s188 = sshll.u32 [#allocation8], 4
      %s189 = int_to_ptr.vmem [resolvable:$true] %s188
      %194 = dma.vmem_to_hbm [thread:$0]  %s189, 512, %s2, [#allocation5], 128, 128, 8
    $region29: #{tpu_custom_call.1} parent=1 // pred_fallthru
      _
    // Predicated region
    $region30: #{tpu_custom_call.1} parent=1 // pred_check
      _
    $region31: #{tpu_custom_call.1} parent=1 // pred_check_branch
      %196 = sbr.rel (0) target = $region33
    $region32: #{tpu_custom_call.1} parent=1 // pred_region
      %197 = dma.done [#allocation5], 512
    $region33: #{tpu_custom_call.1} parent=1 // pred_fallthru
      _
    %198 = vsyncpa [#allocation4], 1
    %199 = vsyncpa [#allocation7], 1
    %200 = vsyncpa [#allocation5], 1

</llo_original>
